<compile_context>
chip_gen: v6e
topology: v6e:2x2x1
jax: 0.10.0
libtpu: 0.0.40
codegen_flags: <defaults>
</compile_context>

<pallas_src>
import functools

import jax
import jax.numpy as jnp
import numpy as np
from jax.experimental import pallas as pl
from jax.experimental.pallas import tpu as pltpu


def _round_up(x, m):
    return ((x + m - 1) // m) * m


def _supcon_kernel(anchor_ref, contrast_ref, a_lab_ref, c_lab_ref, loss_ref, *,
                   temperature, base_temperature):
    # anchor_ref  : [TM, Dp]  anchor feature row block (f32 or bf16)
    # contrast_ref: [N,  Dp]  full contrast feature matrix (resident)
    # a_lab_ref   : [TM, 1]   int32 anchor labels (padded rows = -1)
    # c_lab_ref   : [1,  N]   int32 contrast labels
    # loss_ref    : [TM, 1]   f32 per-anchor-row loss
    inv_t = 1.0 / temperature

    # Fold 1/temperature into the (small) anchor block instead of the [TM, N]
    # logits tile; stays in the input dtype (bf16 on the fast MXU path).
    a = anchor_ref[...] * inv_t
    c = contrast_ref[...]

    # [TM, N] = A . C^T via contraction of the last dim of BOTH operands — the
    # MXU handles this directly, no transpose / extra [Dp, N] copy.
    logits = jax.lax.dot_general(
        a, c, dimension_numbers=(((1,), (1,)), ((), ())),
        preferred_element_type=jnp.float32)

    tm, n = logits.shape
    row0 = pl.program_id(0) * tm
    row_ids = row0 + jax.lax.broadcasted_iota(jnp.int32, (tm, n), 0)
    col_ids = jax.lax.broadcasted_iota(jnp.int32, (tm, n), 1)
    not_self = row_ids != col_ids                       # logits_mask (diag zeroed)

    # Row-max subtraction (detach is a no-op in the forward pass).
    row_max = jnp.max(logits, axis=1, keepdims=True)
    logits = logits - row_max

    # Denominator: sum of exp over all columns except self-contrast.  The exp
    # is the EUP bottleneck; the select rides in spare VPU slots.
    e = jnp.where(not_self, jnp.exp(logits), 0.0)
    log_prob = logits - jnp.log(jnp.sum(e, axis=1, keepdims=True))

    # Positive-pair mask built in-kernel from labels (no [N, N] HBM input):
    # same label AND not the self-contrast column.
    pos = jnp.where(
        jnp.logical_and(a_lab_ref[...] == c_lab_ref[...], not_self), 1.0, 0.0)
    n_pos = jnp.sum(pos, axis=1, keepdims=True)
    n_pos = jnp.where(n_pos < 1e-6, 1.0, n_pos)
    mean_log_prob_pos = jnp.sum(pos * log_prob, axis=1, keepdims=True) / n_pos

    loss_ref[...] = (-(temperature / base_temperature)) * mean_log_prob_pos


def supcon_loss(features, labels=None, mask=None, temperature=0.07,
                contrast_mode='all', base_temperature=0.07,
                row_block=128, feature_dtype=None):
    """SupCon forward.  features: [bsz, n_views, ...]; labels: [bsz] int."""
    if features.ndim < 3:
        raise ValueError('`features` needs to be [bsz, n_views, ...]')
    if features.ndim > 3:
        features = features.reshape(features.shape[0], features.shape[1], -1)
    bsz, n_views, dim = features.shape

    if labels is not None and mask is not None:
        raise ValueError('Cannot define both `labels` and `mask`')
    if mask is not None:
        # TODO(synk): arbitrary (possibly asymmetric) [bsz, bsz] masks cannot be
        # expressed as in-kernel label equality; that path is not wired up.
        raise NotImplementedError('explicit `mask` not supported; use `labels` or None')
    if labels is None:
        # SimCLR case: eye(bsz) mask == "same sample index" positives.
        labels = jnp.arange(bsz, dtype=jnp.int32)
    else:
        labels = jnp.asarray(labels).reshape(-1)
        if labels.shape[0] != bsz:
            raise ValueError('Num of labels does not match num of features')
        labels = labels.astype(jnp.int32)

    if feature_dtype is None:
        # Pass jnp.bfloat16 here for the ~2x MXU fast path on v6e / v7x.
        feature_dtype = features.dtype

    # contrast_feature = cat(unbind(features, dim=1), dim=0)   (view-major rows)
    contrast = jnp.transpose(features, (1, 0, 2)).reshape(n_views * bsz, dim)
    contrast = contrast.astype(feature_dtype)
    c_labels = jnp.tile(labels, n_views)               # label of row v*bsz + b
    n = n_views * bsz

    if contrast_mode == 'all':
        anchor, a_labels, na = contrast, c_labels, n
    elif contrast_mode == 'one':
        anchor, a_labels, na = contrast[:bsz], labels, bsz
    else:
        raise ValueError(f'Unknown mode: {contrast_mode}')

    # --- tiling / padding ----------------------------------------------------
    d_pad = _round_up(dim, 128)                        # lane-dense feature dim
    tm = _round_up(min(int(row_block), na), 8)         # anchor rows per grid step
    na_pad = _round_up(na, tm)
    num_tiles = na_pad // tm

    anchor_p = jnp.zeros((na_pad, d_pad), feature_dtype).at[:na, :dim].set(anchor)
    contrast_p = jnp.zeros((n, d_pad), feature_dtype).at[:, :dim].set(contrast)
    a_lab_p = jnp.full((na_pad, 1), -1, jnp.int32).at[:na, 0].set(a_labels)
    c_lab_p = c_labels.reshape(1, n)

    kernel = functools.partial(_supcon_kernel,
                               temperature=float(temperature),
                               base_temperature=float(base_temperature))

    feat_bytes = jnp.dtype(feature_dtype).itemsize
    cost = pl.CostEstimate(
        flops=2 * na_pad * n * d_pad,
        transcendentals=na_pad * n,
        bytes_accessed=(na_pad + n) * d_pad * feat_bytes + 4 * (na_pad + n) + 4 * na_pad)

    # VMEM budget: double-buffered anchor stream + resident contrast matrix
    # (budget 2 buffers) + ~8 live [TM, N] f32 temporaries, with 2x headroom,
    # capped at v7x's 64 MiB physical VMEM.
    vmem_est = (2 * tm * d_pad * feat_bytes
                + 2 * n * d_pad * feat_bytes
                + 8 * 4 * tm * n
                + 4 * (2 * tm + 2 * n) + 2 * 4 * tm)
    vmem_limit = int(min(max(2 * vmem_est, 8 << 20), 64 << 20))

    loss_rows = pl.pallas_call(
        kernel,
        out_shape=jax.ShapeDtypeStruct((na_pad, 1), jnp.float32),
        grid=(num_tiles,),
        in_specs=[
            pl.BlockSpec((tm, d_pad), lambda i: (i, 0)),   # anchor row stream
            pl.BlockSpec((n, d_pad), lambda i: (0, 0)),    # resident contrast matrix
            pl.BlockSpec((tm, 1), lambda i: (i, 0)),       # anchor labels (column)
            pl.BlockSpec((1, n), lambda i: (0, 0)),        # contrast labels (row)
        ],
        out_specs=pl.BlockSpec((tm, 1), lambda i: (i, 0)), # per-anchor-row loss
        compiler_params=pltpu.CompilerParams(
            dimension_semantics=("parallel",),
            vmem_limit_bytes=vmem_limit),
        cost_estimate=cost,
    )(anchor_p, contrast_p, a_lab_p, c_lab_p)

    # loss.view(anchor_count, batch_size).mean() == mean over the na real rows.
    return jnp.mean(loss_rows[:na, 0])


def _reference_supcon(features, labels=None, mask=None, temperature=0.07,
                      contrast_mode='all', base_temperature=0.07):
    """Pure-JAX reference mirroring the PyTorch forward."""
    bsz, n_views, dim = features.shape
    if labels is None and mask is None:
        mask = jnp.eye(bsz, dtype=jnp.float32)
    elif labels is not None:
        labels = labels.reshape(-1, 1)
        mask = (labels == labels.T).astype(jnp.float32)
    else:
        mask = mask.astype(jnp.float32)
    contrast = jnp.transpose(features, (1, 0, 2)).reshape(n_views * bsz, dim)
    if contrast_mode == 'one':
        anchor, anchor_count = features[:, 0], 1
    else:
        anchor, anchor_count = contrast, n_views
    na, n = anchor_count * bsz, n_views * bsz
    logits = anchor @ contrast.T / temperature
    logits = logits - jnp.max(logits, axis=1, keepdims=True)
    mask = jnp.tile(mask, (anchor_count, n_views))
    logits_mask = 1.0 - jnp.eye(na, n, dtype=jnp.float32)
    mask = mask * logits_mask
    exp_logits = jnp.exp(logits) * logits_mask
    log_prob = logits - jnp.log(exp_logits.sum(1, keepdims=True))
    pos = mask.sum(1)
    pos = jnp.where(pos < 1e-6, 1.0, pos)
    mean_log_prob_pos = (mask * log_prob).sum(1) / pos
    loss = -(temperature / base_temperature) * mean_log_prob_pos
    return loss.reshape(anchor_count, bsz).mean()


if __name__ == "__main__":
    key = jax.random.PRNGKey(0)
    kf, kl, kf2, kl2 = jax.random.split(key, 4)

    bsz, n_views, dim = 8, 2, 32
    features = jax.random.normal(kf, (bsz, n_views, dim), dtype=jnp.float32)
    features = features / jnp.linalg.norm(features, axis=-1, keepdims=True)
    labels = jax.random.randint(kl, (bsz,), 0, 3)

    # 1) supervised, contrast_mode='all', f32 (row_block=8 -> 2 grid tiles)
    loss = supcon_loss(features, labels=labels, row_block=8)
    jax.block_until_ready(loss)
    ref = _reference_supcon(features, labels=labels)
    assert np.allclose(np.asarray(loss), np.asarray(ref), rtol=2e-4, atol=1e-4), (
        float(loss), float(ref))

    # 2) unsupervised SimCLR path (labels=None -> eye mask), f32
    loss_u = supcon_loss(features, row_block=8)
    ref_u = _reference_supcon(features)
    assert np.allclose(np.asarray(loss_u), np.asarray(ref_u), rtol=2e-4, atol=1e-4), (
        float(loss_u), float(ref_u))

    # 3) bf16 MXU feed (v6e/v7x fast path), softmax math stays f32 -> loose tol
    loss_bf16 = supcon_loss(features, labels=labels, row_block=8,
                            feature_dtype=jnp.bfloat16)
    assert np.allclose(np.asarray(loss_bf16), np.asarray(ref), rtol=1e-1, atol=2.5e-1), (
        float(loss_bf16), float(ref))

    # 4) contrast_mode='one' (anchor = first view only)
    loss_one = supcon_loss(features, labels=labels, contrast_mode='one')
    ref_one = _reference_supcon(features, labels=labels, contrast_mode='one')
    assert np.allclose(np.asarray(loss_one), np.asarray(ref_one), rtol=2e-4, atol=1e-4), (
        float(loss_one), float(ref_one))

    # 5) ragged batch (N not a multiple of the row tile) exercises row padding
    bsz2 = 7
    f2 = jax.random.normal(kf2, (bsz2, n_views, dim), dtype=jnp.float32)
    f2 = f2 / jnp.linalg.norm(f2, axis=-1, keepdims=True)
    l2 = jax.random.randint(kl2, (bsz2,), 0, 3)
    loss2 = supcon_loss(f2, labels=l2, row_block=8)
    ref2 = _reference_supcon(f2, labels=l2)
    assert np.allclose(np.asarray(loss2), np.asarray(ref2), rtol=2e-4, atol=1e-4), (
        float(loss2), float(ref2))

    print("KERNEL_OK")
</pallas_src>

<mosaic_0001>
module attributes {stable_mosaic.version = 11 : i64} {
  func.func @_supcon_kernel(%arg0: i32, %arg1: memref<8x128xf32, #tpu.memory_space<vmem>>, %arg2: memref<16x128xf32, #tpu.memory_space<vmem>>, %arg3: memref<8x1xi32, #tpu.memory_space<vmem>>, %arg4: memref<1x16xi32, #tpu.memory_space<vmem>>, %arg5: memref<8x1xf32, #tpu.memory_space<vmem>>) attributes {dimension_semantics = [#tpu.dimension_semantics<parallel>], iteration_bounds = array<i64: 2>, scalar_prefetch = 0 : i64, scratch_operands = 0 : i64, tpu.core_type = #tpu.core_type<tc>, window_params = [{transform_indices = @transform_0, window_bounds = array<i64: 8, 128>}, {pipeline_mode = #tpu.pipeline_mode<synchronous>, transform_indices = @transform_1, window_bounds = array<i64: 16, 128>}, {transform_indices = @transform_2, window_bounds = array<i64: 8, 1>}, {pipeline_mode = #tpu.pipeline_mode<synchronous>, transform_indices = @transform_3, window_bounds = array<i64: 1, 16>}, {transform_indices = @transform_4, window_bounds = array<i64: 8, 1>}]} {
    %c0 = arith.constant 0 : index
    %c0_0 = arith.constant 0 : index
    %0 = vector.load %arg1[%c0, %c0_0] : memref<8x128xf32, #tpu.memory_space<vmem>>, vector<8x128xf32>
    %cst = arith.constant 14.2857141 : f32
    %1 = vector.broadcast %cst : f32 to vector<8x128xf32>
    %2 = arith.mulf %0, %1 : vector<8x128xf32>
    %c0_1 = arith.constant 0 : index
    %c0_2 = arith.constant 0 : index
    %3 = vector.load %arg2[%c0_1, %c0_2] : memref<16x128xf32, #tpu.memory_space<vmem>>, vector<16x128xf32>
    %cst_3 = arith.constant dense<0.000000e+00> : vector<8x16xf32>
    %4 = tpu.matmul %2, %3, %cst_3 {dimension_numbers = #tpu.dot_dimension_numbers<[1], [1], [0], [0], [0, 0, 1, 0], [], []>} : vector<8x128xf32>, vector<16x128xf32>, vector<8x16xf32> -> vector<8x16xf32>
    %c8_i32 = arith.constant 8 : i32
    %5 = arith.muli %arg0, %c8_i32 : i32
    %6 = tpu.iota {dimensions = array<i32: 0>} : vector<8x16xi32>
    %7 = vector.broadcast %5 : i32 to vector<8x16xi32>
    %8 = arith.addi %7, %6 : vector<8x16xi32>
    %9 = tpu.iota {dimensions = array<i32: 1>} : vector<8x16xi32>
    %10 = arith.cmpi ne, %8, %9 : vector<8x16xi32>
    %cst_4 = arith.constant dense<0xFF800000> : vector<8xf32>
    %11 = vector.multi_reduction <maximumf>, %4, %cst_4 [1] : vector<8x16xf32> to vector<8xf32>
    %12 = vector.shape_cast %11 : vector<8xf32> to vector<8x1xf32>
    %13 = vector.broadcast %12 : vector<8x1xf32> to vector<8x16xf32>
    %14 = arith.subf %4, %13 : vector<8x16xf32>
    %15 = math.exp %14 : vector<8x16xf32>
    %cst_5 = arith.constant 0.000000e+00 : f32
    %16 = vector.broadcast %cst_5 : f32 to vector<8x16xf32>
    %17 = arith.select %10, %15, %16 : vector<8x16xi1>, vector<8x16xf32>
    %cst_6 = arith.constant dense<0.000000e+00> : vector<8xf32>
    %18 = vector.multi_reduction <add>, %17, %cst_6 [1] : vector<8x16xf32> to vector<8xf32>
    %19 = vector.shape_cast %18 : vector<8xf32> to vector<8x1xf32>
    %20 = math.log %19 : vector<8x1xf32>
    %21 = vector.broadcast %20 : vector<8x1xf32> to vector<8x16xf32>
    %22 = arith.subf %14, %21 : vector<8x16xf32>
    %c0_7 = arith.constant 0 : index
    %c0_8 = arith.constant 0 : index
    %23 = vector.load %arg3[%c0_7, %c0_8] : memref<8x1xi32, #tpu.memory_space<vmem>>, vector<8x1xi32>
    %c0_9 = arith.constant 0 : index
    %c0_10 = arith.constant 0 : index
    %24 = vector.load %arg4[%c0_9, %c0_10] : memref<1x16xi32, #tpu.memory_space<vmem>>, vector<1x16xi32>
    %25 = vector.broadcast %23 : vector<8x1xi32> to vector<8x16xi32>
    %26 = vector.broadcast %24 : vector<1x16xi32> to vector<8x16xi32>
    %27 = arith.cmpi eq, %25, %26 : vector<8x16xi32>
    %28 = arith.andi %27, %10 : vector<8x16xi1>
    %cst_11 = arith.constant 1.000000e+00 : f32
    %cst_12 = arith.constant 0.000000e+00 : f32
    %29 = vector.broadcast %cst_11 : f32 to vector<8x16xf32>
    %30 = vector.broadcast %cst_12 : f32 to vector<8x16xf32>
    %31 = arith.select %28, %29, %30 : vector<8x16xi1>, vector<8x16xf32>
    %cst_13 = arith.constant dense<0.000000e+00> : vector<8xf32>
    %32 = vector.multi_reduction <add>, %31, %cst_13 [1] : vector<8x16xf32> to vector<8xf32>
    %33 = vector.shape_cast %32 : vector<8xf32> to vector<8x1xf32>
    %cst_14 = arith.constant 9.99999997E-7 : f32
    %34 = vector.broadcast %cst_14 : f32 to vector<8x1xf32>
    %35 = arith.cmpf olt, %33, %34 : vector<8x1xf32>
    %cst_15 = arith.constant 1.000000e+00 : f32
    %36 = vector.broadcast %cst_15 : f32 to vector<8x1xf32>
    %37 = arith.select %35, %36, %33 : vector<8x1xi1>, vector<8x1xf32>
    %38 = arith.mulf %31, %22 : vector<8x16xf32>
    %cst_16 = arith.constant dense<0.000000e+00> : vector<8xf32>
    %39 = vector.multi_reduction <add>, %38, %cst_16 [1] : vector<8x16xf32> to vector<8xf32>
    %40 = vector.shape_cast %39 : vector<8xf32> to vector<8x1xf32>
    %41 = arith.divf %40, %37 : vector<8x1xf32>
    %cst_17 = arith.constant -1.000000e+00 : f32
    %42 = vector.broadcast %cst_17 : f32 to vector<8x1xf32>
    %43 = arith.mulf %42, %41 : vector<8x1xf32>
    %c0_18 = arith.constant 0 : index
    %c0_19 = arith.constant 0 : index
    %44 = vector.load %arg5[%c0_18, %c0_19] : memref<8x1xf32, #tpu.memory_space<vmem>>, vector<8x1xf32>
    tpu.vector_store %arg5[%c0_18, %c0_19], %43 {strides = array<i32>} : memref<8x1xf32, #tpu.memory_space<vmem>>, vector<8x1xf32>,
    return
  }
  func.func @transform_0(%arg0: i32) -> (i32, i32) {
    %c0_i32 = arith.constant 0 : i32
    %c0_i32_0 = arith.constant 0 : i32
    return %arg0, %c0_i32 : i32, i32
  }
  func.func @transform_1(%arg0: i32) -> (i32, i32) {
    %c0_i32 = arith.constant 0 : i32
    %c0_i32_0 = arith.constant 0 : i32
    %c0_i32_1 = arith.constant 0 : i32
    return %c0_i32, %c0_i32_0 : i32, i32
  }
  func.func @transform_2(%arg0: i32) -> (i32, i32) {
    %c0_i32 = arith.constant 0 : i32
    %c0_i32_0 = arith.constant 0 : i32
    return %arg0, %c0_i32 : i32, i32
  }
  func.func @transform_3(%arg0: i32) -> (i32, i32) {
    %c0_i32 = arith.constant 0 : i32
    %c0_i32_0 = arith.constant 0 : i32
    %c0_i32_1 = arith.constant 0 : i32
    return %c0_i32, %c0_i32_0 : i32, i32
  }
  func.func @transform_4(%arg0: i32) -> (i32, i32) {
    %c0_i32 = arith.constant 0 : i32
    %c0_i32_0 = arith.constant 0 : i32
    return %arg0, %c0_i32 : i32, i32
  }
}

</mosaic_0001>

<llo_original>
// kernel: tpu_custom_call.1
$region0: #{tpu_custom_call.1}
  #allocation0 [shape = 'u32[]', space=smem, size = 0x4, offset = 0x4, fixed_abs, tag = 'smem constant byte address 0x4 - core index']
  #allocation1 [shape = 'u32[144,128]{1,0:T(1,128)}', space=vmem, size = 0x12000, scoped, tag = 'internal scratch']
  %s0 = inlined_call_operand.vmem [shape: f32[16,128], index: 0, kind: input, shape index: {}]
  %s1 = inlined_call_operand.hbm [shape: f32[16,128], index: 1, kind: input, shape index: {}]
  %s2 = inlined_call_operand.vmem [shape: s32[16,1], index: 2, kind: input, shape index: {}]
  %s3 = inlined_call_operand.vmem [shape: s32[1,16], index: 3, kind: input, shape index: {}]
  %s4 = inlined_call_operand.vmem [shape: f32[16,1], index: 4, kind: output, shape index: {}]
  %s5 = sld [smem:[#allocation0]]
  $region53: #{tpu_custom_call.1} parent=0
    _
  %s7 = ssub.s32 1, %s5
  %s8 = scalar_select 0, %s7, %s5
  $region1: #{tpu_custom_call.1} parent=0
    #allocation2 [shape = 'u8[8192]{0}', space=vmem, size = 0x2000, scoped, tag = 'input window, operand 1, single buffered']
    #allocation3 [shape = 's32[2]{0}', space=sflag, size = 0x8, scoped, tag = 'scoped memory for tpu_custom_call.1']
    %9 = vsyncpa [#allocation3], 0
    loop: start=0, step=1, limit=4
    $region2: #{tpu_custom_call.1} parent=1 // loop_pre_header
      _
    $region3: #{tpu_custom_call.1} parent=1 // loop_header
      %s11 = sphi 0, %s15
      %p12 = scmp.ge.s32.totalorder %s11, 4
      %s21 = sphi 0, %s23
      %s24 = sphi 0, %s21
      %s25 = sphi 0, %s24
      %s41 = sphi 0, %s25
      %s45 = sphi 0, %s45
      %s47 = sphi 0, %s45
      %s48 = sphi 0, %s47
      %s62 = sphi 0, %s48
      %s68 = sphi 0, %s70
      %s71 = sphi 0, %s68
      %s72 = sphi 0, %s71
      %s88 = sphi 0, %s72
      %s92 = sphi 0, %s92
      %s94 = sphi 0, %s92
      %s95 = sphi 0, %s94
      %s109 = sphi 0, %s95
      %s115 = sphi 0, %s117
      %s118 = sphi 0, %s115
      %s119 = sphi 0, %s118
      %s135 = sphi 0, %s119
    $region4: #{tpu_custom_call.1} parent=1 // loop_header_branch
      %14 = sbr.rel (%p12) target = $region8
    $region5: #{tpu_custom_call.1} parent=1 // loop_body
      %s16 = ssub.s32 %s11, 1
      %s17 = ssub.s32 %s11, 2
      %s18 = sadd.s32 %s11, 1
      %s19 = ssub.s32 %s11, %s18
      %p20 = scmp.eq.s32.totalorder %s19, 0
      %s22 = sadd.s32 %s21, 1
      %s23 = scalar_select %p20, %s21, %s22
      %p26 = pneg %p20
      %p27 = scmp.eq.s32.totalorder %s11, 1
      %p28 = por %p26, %p27
      %p29 = scmp.ne.s32.totalorder %s21, %s24
      %p30 = scmp.eq.s32.totalorder %s11, 0
      %p31 = por %p29, %p30
      %p32 = scmp.ne.s32.totalorder %s21, %s24
      %p33 = scmp.eq.s32.totalorder %s16, 1
      %p34 = por %p32, %p33
      %p35 = scmp.ne.s32.totalorder %s24, %s25
      %p36 = scmp.eq.s32.totalorder %s16, 0
      %p37 = por %p35, %p36
      %p38 = scmp.ne.s32.totalorder %s24, %s25
      %p39 = scmp.eq.s32.totalorder %s17, 1
      %p40 = por %p38, %p39
      %p42 = scmp.ne.s32.totalorder %s25, %s41
      %p43 = scmp.eq.s32.totalorder %s17, 0
      %p44 = por %p42, %p43
      %s46 = sadd.s32 %s45, 1
      %p49 = scmp.eq.s32.totalorder %s11, 1
      %p50 = scmp.ne.s32.totalorder %s45, %s47
      %p51 = scmp.eq.s32.totalorder %s11, 0
      %p52 = por %p50, %p51
      %p53 = scmp.ne.s32.totalorder %s45, %s47
      %p54 = scmp.eq.s32.totalorder %s16, 1
      %p55 = por %p53, %p54
      %p56 = scmp.ne.s32.totalorder %s47, %s48
      %p57 = scmp.eq.s32.totalorder %s16, 0
      %p58 = por %p56, %p57
      %p59 = scmp.ne.s32.totalorder %s47, %s48
      %p60 = scmp.eq.s32.totalorder %s17, 1
      %p61 = por %p59, %p60
      %p63 = scmp.ne.s32.totalorder %s48, %s62
      %p64 = scmp.eq.s32.totalorder %s17, 0
      %p65 = por %p63, %p64
      %s66 = ssub.s32 %s11, %s18
      %p67 = scmp.eq.s32.totalorder %s66, 0
      %s69 = sadd.s32 %s68, 1
      %s70 = scalar_select %p67, %s68, %s69
      %p73 = pneg %p67
      %p74 = scmp.eq.s32.totalorder %s11, 1
      %p75 = por %p73, %p74
      %p76 = scmp.ne.s32.totalorder %s68, %s71
      %p77 = scmp.eq.s32.totalorder %s11, 0
      %p78 = por %p76, %p77
      %p79 = scmp.ne.s32.totalorder %s68, %s71
      %p80 = scmp.eq.s32.totalorder %s16, 1
      %p81 = por %p79, %p80
      %p82 = scmp.ne.s32.totalorder %s71, %s72
      %p83 = scmp.eq.s32.totalorder %s16, 0
      %p84 = por %p82, %p83
      %p85 = scmp.ne.s32.totalorder %s71, %s72
      %p86 = scmp.eq.s32.totalorder %s17, 1
      %p87 = por %p85, %p86
      %p89 = scmp.ne.s32.totalorder %s72, %s88
      %p90 = scmp.eq.s32.totalorder %s17, 0
      %p91 = por %p89, %p90
      %s93 = sadd.s32 %s92, 1
      %p96 = scmp.eq.s32.totalorder %s11, 1
      %p97 = scmp.ne.s32.totalorder %s92, %s94
      %p98 = scmp.eq.s32.totalorder %s11, 0
      %p99 = por %p97, %p98
      %p100 = scmp.ne.s32.totalorder %s92, %s94
      %p101 = scmp.eq.s32.totalorder %s16, 1
      %p102 = por %p100, %p101
      %p103 = scmp.ne.s32.totalorder %s94, %s95
      %p104 = scmp.eq.s32.totalorder %s16, 0
      %p105 = por %p103, %p104
      %p106 = scmp.ne.s32.totalorder %s94, %s95
      %p107 = scmp.eq.s32.totalorder %s17, 1
      %p108 = por %p106, %p107
      %p110 = scmp.ne.s32.totalorder %s95, %s109
      %p111 = scmp.eq.s32.totalorder %s17, 0
      %p112 = por %p110, %p111
      %s113 = ssub.s32 %s11, %s18
      %p114 = scmp.eq.s32.totalorder %s113, 0
      %s116 = sadd.s32 %s115, 1
      %s117 = scalar_select %p114, %s115, %s116
      %p120 = pneg %p114
      %p121 = scmp.eq.s32.totalorder %s11, 1
      %p122 = por %p120, %p121
      %p123 = scmp.ne.s32.totalorder %s115, %s118
      %p124 = scmp.eq.s32.totalorder %s11, 0
      %p125 = por %p123, %p124
      %p126 = scmp.ne.s32.totalorder %s115, %s118
      %p127 = scmp.eq.s32.totalorder %s16, 1
      %p128 = por %p126, %p127
      %p129 = scmp.ne.s32.totalorder %s118, %s119
      %p130 = scmp.eq.s32.totalorder %s16, 0
      %p131 = por %p129, %p130
      %p132 = scmp.ne.s32.totalorder %s118, %s119
      %p133 = scmp.eq.s32.totalorder %s17, 1
      %p134 = por %p132, %p133
      %p136 = scmp.ne.s32.totalorder %s119, %s135
      %p137 = scmp.eq.s32.totalorder %s17, 0
      %p138 = por %p136, %p137
      %p139 = scmp.le.s32.totalorder 1, %s11
      %p140 = scmp.lt.s32.totalorder %s11, 3
      %p141 = pnand %p139, %p140
      %p142 = pneg %p141
      // Predicated region
      $region9: #{tpu_custom_call.1} parent=5 // pred_check
        _
      $region10: #{tpu_custom_call.1} parent=5 // pred_check_branch
        %144 = sbr.rel (%p141) target = $region12
      $region11: #{tpu_custom_call.1} parent=5 // pred_region
        %s145 = ssub.s32 %s11, 1
        // Predicated region
        $region13: #{tpu_custom_call.1} parent=11 // pred_check
          %p146 = pneg %p58
        $region14: #{tpu_custom_call.1} parent=11 // pred_check_branch
          %148 = sbr.rel (%p146) target = $region16
        $region15: #{tpu_custom_call.1} parent=11 // pred_region
          %s150 = ssub.s32 256, 256
          %151 = vsyncadd [#allocation3], %s150
          %s152 = sshll.u32 [#allocation2], 4
          %s153 = int_to_ptr.vmem [resolvable:$true] %s152
          %158 = dma.hbm_to_vmem [thread:$0]  %s1, 256, %s153, [#allocation3], 128, 128, 8
        $region16: #{tpu_custom_call.1} parent=11 // pred_fallthru
          _
        // Predicated region
        $region17: #{tpu_custom_call.1} parent=11 // pred_check
          %p159 = pneg %p105
        $region18: #{tpu_custom_call.1} parent=11 // pred_check_branch
          %161 = sbr.rel (%p159) target = $region20
        $region19: #{tpu_custom_call.1} parent=11 // pred_region
          _
        $region20: #{tpu_custom_call.1} parent=11 // pred_fallthru
          _
      $region12: #{tpu_custom_call.1} parent=5 // pred_fallthru
        _
      %p162 = scmp.lt.s32.totalorder %s11, 2
      // Predicated region
      $region21: #{tpu_custom_call.1} parent=5 // pred_check
        %p163 = pneg %p162
      $region22: #{tpu_custom_call.1} parent=5 // pred_check_branch
        %165 = sbr.rel (%p163) target = $region24
      $region23: #{tpu_custom_call.1} parent=5 // pred_region
        // Predicated region
        $region25: #{tpu_custom_call.1} parent=23 // pred_check
          %p166 = pneg %p31
        $region26: #{tpu_custom_call.1} parent=23 // pred_check_branch
          %168 = sbr.rel (%p166) target = $region28
        $region27: #{tpu_custom_call.1} parent=23 // pred_region
          %p169 = scmp.lt.s32.totalorder %s11, 1
          %s170 = scalar_select %p169, %s11, 1
          %s171 = smul.addr %s170, 8
          %s172 = scalar_lea.vmem %s0, %s171
        $region28: #{tpu_custom_call.1} parent=23 // pred_fallthru
          _
        // Predicated region
        $region29: #{tpu_custom_call.1} parent=23 // pred_check
          %p173 = pneg %p78
        $region30: #{tpu_custom_call.1} parent=23 // pred_check_branch
          %175 = sbr.rel (%p173) target = $region32
        $region31: #{tpu_custom_call.1} parent=23 // pred_region
          %p176 = scmp.lt.s32.totalorder %s11, 1
          %s177 = scalar_select %p176, %s11, 1
          %s178 = smul.addr %s177, 8
          %s179 = scalar_lea.vmem %s2, %s178
        $region32: #{tpu_custom_call.1} parent=23 // pred_fallthru
          _
      $region24: #{tpu_custom_call.1} parent=5 // pred_fallthru
        _
      %p180 = scmp.le.s32.totalorder 1, %s11
      %p181 = scmp.lt.s32.totalorder %s11, 3
      %p182 = pnand %p180, %p181
      %p183 = pneg %p182
      // Predicated region
      $region33: #{tpu_custom_call.1} parent=5 // pred_check
        _
      $region34: #{tpu_custom_call.1} parent=5 // pred_check_branch
        %185 = sbr.rel (%p182) target = $region36
      $region35: #{tpu_custom_call.1} parent=5 // pred_region
        %s186 = ssub.s32 %s11, 1
        // Predicated region
        $region37: #{tpu_custom_call.1} parent=35 // pred_check
          %p187 = pneg %p58
        $region38: #{tpu_custom_call.1} parent=35 // pred_check_branch
          %189 = sbr.rel (%p187) target = $region40
        $region39: #{tpu_custom_call.1} parent=35 // pred_region
          %190 = dma.done [#allocation3], 256
        $region40: #{tpu_custom_call.1} parent=35 // pred_fallthru
          _
        %p191 = scmp.lt.s32.totalorder %s16, 1
        %s192 = scalar_select %p191, %s16, 1
        %s193 = smul.addr %s192, 8
        %s194 = scalar_lea.vmem %s0, %s193
        %p195 = pneg %p37
        %p196 = pneg %p34
        %p197 = pneg %p58
        %p198 = pneg %p55
        %p199 = scmp.lt.s32.totalorder %s16, 1
        %s200 = scalar_select %p199, %s16, 1
        %s201 = smul.addr %s200, 8
        %s202 = scalar_lea.vmem %s2, %s201
        %p203 = pneg %p84
        %p204 = pneg %p81
        %p205 = pneg %p105
        %p206 = pneg %p102
        %p207 = pneg %p131
        %p208 = pneg %p128
        %p209 = scmp.lt.s32.totalorder %s16, 1
        %s210 = scalar_select %p209, %s16, 1
        %s211 = smul.addr %s210, 8
        %s212 = scalar_lea.vmem %s4, %s211
        %p213 = scmp.lt.s32.totalorder %s16, 1
        %s214 = scalar_select %p213, %s16, 1
        %s215 = smul.addr %s214, 8
        %s216 = scalar_lea.vmem %s0, %s215
        %p217 = scmp.lt.s32.totalorder %s16, 1
        %s218 = scalar_select %p217, %s16, 1
        %s219 = smul.addr %s218, 8
        %s220 = scalar_lea.vmem %s2, %s219
        %p221 = scmp.lt.s32.totalorder %s16, 1
        %s222 = scalar_select %p221, %s16, 1
        %s223 = smul.addr %s222, 8
        %s224 = scalar_lea.vmem %s4, %s223
        %v225 = vld [vmem:[%s216] sm:$0xff]
        %v226 = vmul.f32 %v225, 14.285714
        %v227 = vld [vmem:[#allocation2] sm:$0xff]
        %v228 = vld [vmem:[#allocation2 + $0x8] sm:$0xff]
        %229 = vmatprep.subr.mxu0 0.0
        %230 = vmatpush1.xpose.msra.mxu0 0.0
        %231 = vmatprep.subr.mxu0 0.0
        %232 = vmatpush1.xpose.msra.mxu0 0.0
        %233 = vmatprep.subr.mxu0 0.0
        %234 = vmatpush1.xpose.msra.mxu0 0.0
        %235 = vmatprep.subr.mxu0 0.0
        %236 = vmatpush1.xpose.msra.mxu0 0.0
        %237 = vmatprep.subr.mxu0 0.0
        %238 = vmatpush1.xpose.msra.mxu0 0.0
        %239 = vmatprep.subr.mxu0 0.0
        %240 = vmatpush1.xpose.msra.mxu0 0.0
        %241 = vmatprep.subr.mxu0 0.0
        %242 = vmatpush1.xpose.msra.mxu0 0.0
        %243 = vmatprep.subr.mxu0 0.0
        %244 = vmatpush1.xpose.msra.mxu0 0.0
        %245 = vmatprep.subr.mxu0 0.0
        %246 = vmatpush1.xpose.msra.mxu0 0.0
        %247 = vmatprep.subr.mxu0 0.0
        %248 = vmatpush1.xpose.msra.mxu0 0.0
        %249 = vmatprep.subr.mxu0 0.0
        %250 = vmatpush1.xpose.msra.mxu0 0.0
        %251 = vmatprep.subr.mxu0 0.0
        %252 = vmatpush1.xpose.msra.mxu0 0.0
        %253 = vmatprep.subr.mxu0 0.0
        %254 = vmatpush1.xpose.msra.mxu0 0.0
        %255 = vmatprep.subr.mxu0 0.0
        %256 = vmatpush1.xpose.msra.mxu0 0.0
        %257 = vmatprep.subr.mxu0 0.0
        %258 = vmatpush1.xpose.msra.mxu0 %v228
        %259 = vmatprep.subr.mxu0 0.0
        %260 = vmatpush1.xpose.msra.mxu0 %v227
        %261 = vmatprep.subr.mxu0 0.0
        %262 = vmatpush2.xpose.msra.mxu0 0.0
        %263 = vmatprep.subr.mxu0 0.0
        %264 = vmatpush2.xpose.msra.mxu0 0.0
        %265 = vmatprep.subr.mxu0 0.0
        %266 = vmatpush2.xpose.msra.mxu0 0.0
        %267 = vmatprep.subr.mxu0 0.0
        %268 = vmatpush2.xpose.msra.mxu0 0.0
        %269 = vmatprep.subr.mxu0 0.0
        %270 = vmatpush2.xpose.msra.mxu0 0.0
        %271 = vmatprep.subr.mxu0 0.0
        %272 = vmatpush2.xpose.msra.mxu0 0.0
        %273 = vmatprep.subr.mxu0 0.0
        %274 = vmatpush2.xpose.msra.mxu0 0.0
        %275 = vmatprep.subr.mxu0 0.0
        %276 = vmatpush2.xpose.msra.mxu0 0.0
        %277 = vmatprep.subr.mxu0 0.0
        %278 = vmatpush2.xpose.msra.mxu0 0.0
        %279 = vmatprep.subr.mxu0 0.0
        %280 = vmatpush2.xpose.msra.mxu0 0.0
        %281 = vmatprep.subr.mxu0 0.0
        %282 = vmatpush2.xpose.msra.mxu0 0.0
        %283 = vmatprep.subr.mxu0 0.0
        %284 = vmatpush2.xpose.msra.mxu0 0.0
        %285 = vmatprep.subr.mxu0 0.0
        %286 = vmatpush2.xpose.msra.mxu0 0.0
        %287 = vmatprep.subr.mxu0 0.0
        %288 = vmatpush2.xpose.msra.mxu0 0.0
        %289 = vmatprep.subr.mxu0 0.0
        %290 = vmatpush2.xpose.msra.mxu0 0.0
        %291 = vmatprep.subr.mxu0 0.0
        %292 = vmatpush2.xpose.msra.mxu0 0.0
        %293 = vmatprep.mubr.f32.mxu0 0.0
        %294 = vmatmul.mubr.f32.gmra.mxu0 %v226
        %v295 = vpop.f32.mrf.mxu0
        %v296 = vadd.f32 0.0, %v295
        %v297 = vpop.f32.mrf.mxu0
        %298 = vdwg.mxu0
        %s299 = smul.u32 %s16, 8
        %v300 = vlaneseq
        %v301 = vshrl.u32 %v300, 7
        %v302 = vstv %s299
        %v303 = vadd.s32 %v302, %v301
        %v304 = vlaneseq
        %v305 = vand.u32 %v304, 127
        %vm306 = vcmp.ne.s32.totalorder %v303, %v305
        %vm307 = vcmask 130048
        %v308 = vsel %vm307, %v296, -inf
        %309 = vmax.xlane.f32.xlu0 %v308
        %v310 = vpop.xlane.xlu0 %309
        %v311 = vsub.f32 %v296, %v310
        %v312 = vmul.f32 %v311, 1.442695
        %v313 = vpow.pop %v312
        %v314 = vsel %vm306, %v313, 0.0
        %v315 = vsel %vm307, %v314, 0.0
        %316 = vadd.xlane.f32.xlu0 %v315
        %v317 = vpop.xlane.xlu0 %316
        %v318 = vlog2.pop %v317
        %v319 = vmul.f32 %v318, 0.6931472
        %v320 = vsub.f32 %v311, %v319
        %v321 = vld [vmem:[%s220] sm:$0xff]
        %v322 = vld [vmem:[%s3] sm:$0x1]
        %323 = vset.pattern.permute.xlu0 0
        %324 = vperm.xlu0 %323, %v321
        %v325 = vpop.permute.xlu0 %324
        %v326 = vlaneseq
        %v327 = vshrl.u32 %v326, 7
        %v328 = vsub.s32 0, %v327
        %v329 = vrot.slane %v322, %v328
        %vm330 = vcmp.eq.s32.totalorder %v325, %v329
        %vm331 = vmand %vm330, %vm306
        %v332 = vsel %vm331, 1.0, 0.0
        %v333 = vsel %vm307, %v332, 0.0
        %334 = vadd.xlane.f32.xlu0 %v333
        %v335 = vpop.xlane.xlu0 %334
        %vm336 = vcmp.lt.f32.partialorder %v335, 1e-06
        %v337 = vsel %vm336, 1.0, %v335
        %v338 = vmul.f32 %v332, %v320
        %v339 = vsel %vm307, %v338, 0.0
        %340 = vadd.xlane.f32.xlu0 %v339
        %v341 = vpop.xlane.xlu0 %340
        %v342 = vrcp.pop %v337
        %v343 = vmul.f32 %v341, %v342
        %v344 = vmul.f32 %v343, -1.0
        %vm345 = vcmask 7168
        %346 = vst.msk [vmem:[%s224] sm:$0xff] %vm345, %v344
        %p347 = scmp.lt.s32.totalorder %s16, 1
        %s348 = scalar_select %p347, %s16, 1
        %s349 = smul.addr %s348, 8
        %s350 = scalar_lea.vmem %s4, %s349
        // Predicated region
        $region41: #{tpu_custom_call.1} parent=35 // pred_check
          %p351 = pneg %p128
        $region42: #{tpu_custom_call.1} parent=35 // pred_check_branch
          %353 = sbr.rel (%p351) target = $region44
        $region43: #{tpu_custom_call.1} parent=35 // pred_region
          _
        $region44: #{tpu_custom_call.1} parent=35 // pred_fallthru
          _
      $region36: #{tpu_custom_call.1} parent=5 // pred_fallthru
        _
      %p354 = scmp.le.s32.totalorder 2, %s11
      // Predicated region
      $region45: #{tpu_custom_call.1} parent=5 // pred_check
        %p355 = pneg %p354
      $region46: #{tpu_custom_call.1} parent=5 // pred_check_branch
        %357 = sbr.rel (%p355) target = $region48
      $region47: #{tpu_custom_call.1} parent=5 // pred_region
        %s358 = ssub.s32 %s11, 2
        // Predicated region
        $region49: #{tpu_custom_call.1} parent=47 // pred_check
          %p359 = pneg %p134
        $region50: #{tpu_custom_call.1} parent=47 // pred_check_branch
          %361 = sbr.rel (%p359) target = $region52
        $region51: #{tpu_custom_call.1} parent=47 // pred_region
          %p362 = scmp.lt.s32.totalorder %s17, 1
          %s363 = scalar_select %p362, %s17, 1
          %s364 = smul.addr %s363, 8
          %s365 = scalar_lea.vmem %s4, %s364
        $region52: #{tpu_custom_call.1} parent=47 // pred_fallthru
          _
      $region48: #{tpu_custom_call.1} parent=5 // pred_fallthru
        _
    $region6: #{tpu_custom_call.1} parent=1 // loop_footer
      %s15 = sadd.s32 1, %s11
    $region7: #{tpu_custom_call.1} parent=1 // loop_footer_branch
      %10 = sbr.rel target = $region3
    $region8: #{tpu_custom_call.1} parent=1 // loop_exit
      _
    %366 = vsyncpa [#allocation3], 1
    %s367 = scalar_lea.sflag [#allocation3], 1
    %368 = vsyncpa %s367, 1

</llo_original>
